<compile_context>
chip_gen: v5e
topology: v5e:2x2
jax: 0.10.0
libtpu: 0.0.40
codegen_flags: <defaults>
</compile_context>

<pallas_src>
import functools

import jax
import jax.numpy as jnp
from jax.experimental import pallas as pl
from jax.experimental.pallas import tpu as pltpu

_SUBLANE = 8


def _round_up(x, m):
    return ((x + m - 1) // m) * m


def _mlp_kernel_vpu(x_ref, w1_ref, b1_ref, w2_ref, b2_ref, o_ref):
    """VPU path for tiny feature dims: contractions as broadcast multiply-adds."""
    x = x_ref[...]                                   # (tm, in_size)
    tm = x.shape[0]
    in_size = x.shape[1]
    hid = w1_ref.shape[1]
    out_size = o_ref.shape[1]

    # Hidden layer: h = relu(sum_k x[:, k] * w1[k, :] + b1)   (outer products)
    h = jnp.broadcast_to(b1_ref[...], (tm, hid))
    for k in range(in_size):                          # static, tiny trip count
        h = h + x[:, k:k + 1] * w1_ref[k:k + 1, :]
    h = jnp.maximum(h, 0.0)                           # ReLU on the VPU

    # Output layer: y = sum_j h[:, j] * w2[j, :] + b2
    y = jnp.broadcast_to(b2_ref[...], (tm, out_size))
    for j in range(hid):                              # static, tiny trip count
        y = y + h[:, j:j + 1] * w2_ref[j:j + 1, :]

    o_ref[...] = y.astype(o_ref.dtype)


def _mlp_kernel_mxu(x_ref, w1_ref, b1_ref, w2_ref, b2_ref, o_ref):
    """General path for larger feature dims (uses the MXU)."""
    h = jnp.dot(x_ref[...], w1_ref[...], preferred_element_type=jnp.float32)
    h = jnp.maximum(h + b1_ref[...], 0.0)
    y = jnp.dot(h, w2_ref[...], preferred_element_type=jnp.float32) + b2_ref[...]
    o_ref[...] = y.astype(o_ref.dtype)


def nnet_regression_forward(x, w1, b1, w2, b2, *, tm_cap=1024):
    """x: (N, in_size); w1: (in, hid); b1: (1, hid); w2: (hid, out); b2: (1, out).
    Returns (N, out_size) = relu(x @ w1 + b1) @ w2 + b2."""
    n, in_size = x.shape
    hid = w1.shape[1]
    out_size = w2.shape[1]
    f32 = jnp.float32

    # ---- batch tiling -------------------------------------------------------
    if n <= tm_cap:
        # Whole problem in one tile: minimizes fixed per-step cost.
        n_tiles = 1
        tm = max(_round_up(n, _SUBLANE), _SUBLANE)
    else:
        # Even tile count so both v7x TensorCores get work (harmless on v5e/v6e).
        n_tiles = pl.cdiv(n, tm_cap)
        if n_tiles % 2:
            n_tiles += 1
        tm = _round_up(pl.cdiv(n, n_tiles), _SUBLANE)
    n_p = n_tiles * tm

    # Only the batch dim is (cheaply) zero-padded; feature dims stay unpadded.
    xp = x.astype(f32)
    if n_p != n:
        xp = jnp.zeros((n_p, in_size), f32).at[:n].set(xp)
    w1p = w1.astype(f32)
    b1p = b1.astype(f32)
    w2p = w2.astype(f32)
    b2p = b2.astype(f32)

    # Tiny contractions -> VPU; anything bigger -> MXU.
    use_vpu = (in_size <= 8) and (hid <= 32)
    kernel = _mlp_kernel_vpu if use_vpu else _mlp_kernel_mxu

    # Advisory cost on TRUE shapes.
    flops = 2 * n * in_size * hid + 2 * n * hid * out_size
    bytes_accessed = 4 * (n * in_size + in_size * hid + hid
                          + hid * out_size + out_size + n * out_size)

    # TODO(synk): if in/hid/out ever grow into the thousands, split the hidden
    # dim with an "arbitrary" grid axis + f32 accumulator so resident weights
    # fit v7x's 64 MiB VMEM; irrelevant at 1->3->1.
    out = pl.pallas_call(
        kernel,
        out_shape=jax.ShapeDtypeStruct((n_p, out_size), f32),
        grid_spec=pltpu.PrefetchScalarGridSpec(
            num_scalar_prefetch=0,
            grid=(n_tiles,),
            in_specs=[
                pl.BlockSpec((tm, in_size), lambda i: (i, 0)),      # X tile (pipelined)
                pl.BlockSpec((in_size, hid), lambda i: (0, 0)),     # W1 (resident)
                pl.BlockSpec((1, hid), lambda i: (0, 0)),           # b1 (resident)
                pl.BlockSpec((hid, out_size), lambda i: (0, 0)),    # W2 (resident)
                pl.BlockSpec((1, out_size), lambda i: (0, 0)),      # b2 (resident)
            ],
            out_specs=pl.BlockSpec((tm, out_size), lambda i: (i, 0)),
        ),
        compiler_params=pltpu.CompilerParams(
            dimension_semantics=("parallel",),
        ),
        cost_estimate=pl.CostEstimate(
            flops=flops, transcendentals=0, bytes_accessed=bytes_accessed),
    )(xp, w1p, b1p, w2p, b2p)

    if n_p != n:
        out = out[:n]
    return out


def init_params(key, in_size, hidden_size, out_size):
    """Deterministic init mimicking nn.Linear's U(-1/sqrt(fan_in), 1/sqrt(fan_in)).
    Weights are stored pre-transposed as (fan_in, fan_out)."""
    k1, k2, k3, k4 = jax.random.split(key, 4)
    bound1 = 1.0 / jnp.sqrt(jnp.float32(in_size))
    bound2 = 1.0 / jnp.sqrt(jnp.float32(hidden_size))
    w1 = jax.random.uniform(k1, (in_size, hidden_size), jnp.float32, -bound1, bound1)
    b1 = jax.random.uniform(k2, (1, hidden_size), jnp.float32, -bound1, bound1)
    w2 = jax.random.uniform(k3, (hidden_size, out_size), jnp.float32, -bound2, bound2)
    b2 = jax.random.uniform(k4, (1, out_size), jnp.float32, -bound2, bound2)
    return w1, b1, w2, b2


if __name__ == "__main__":
    # Module in the script uses X = df[['age']] -> in_size=1, hidden_size=3, out_size=1.
    in_size, hidden_size, out_size = 1, 3, 1
    batch = 8

    key = jax.random.PRNGKey(0)
    kx, kp = jax.random.split(key)
    x = jax.random.uniform(kx, (batch, in_size), jnp.float32, 18.0, 65.0)  # synthetic "age"
    w1, b1, w2, b2 = init_params(kp, in_size, hidden_size, out_size)

    y = nnet_regression_forward(x, w1, b1, w2, b2)
    jax.block_until_ready(y)

    # Cross-check against plain JAX reference.
    y_ref = jnp.maximum(x @ w1 + b1, 0.0) @ w2 + b2
    assert y.shape == (batch, out_size)
    assert jnp.allclose(y, y_ref, atol=1e-5, rtol=1e-5)

    # Also exercise the multi-tile (even-grid) path with a non-multiple batch.
    big_n = 1500
    xb = jax.random.uniform(kx, (big_n, in_size), jnp.float32, 18.0, 65.0)
    yb = nnet_regression_forward(xb, w1, b1, w2, b2)
    jax.block_until_ready(yb)
    yb_ref = jnp.maximum(xb @ w1 + b1, 0.0) @ w2 + b2
    assert yb.shape == (big_n, out_size)
    assert jnp.allclose(yb, yb_ref, atol=1e-5, rtol=1e-5)

    print("KERNEL_OK")
</pallas_src>

<mosaic_0001>
module attributes {stable_mosaic.version = 11 : i64} {
  func.func @_mlp_kernel_vpu(%arg0: i32, %arg1: memref<8x1xf32, #tpu.memory_space<vmem>>, %arg2: memref<1x3xf32, #tpu.memory_space<vmem>>, %arg3: memref<1x3xf32, #tpu.memory_space<vmem>>, %arg4: memref<3x1xf32, #tpu.memory_space<vmem>>, %arg5: memref<1x1xf32, #tpu.memory_space<vmem>>, %arg6: memref<8x1xf32, #tpu.memory_space<vmem>>) attributes {dimension_semantics = [#tpu.dimension_semantics<parallel>], iteration_bounds = array<i64: 1>, scalar_prefetch = 0 : i64, scratch_operands = 0 : i64, tpu.core_type = #tpu.core_type<tc>, window_params = [{transform_indices = @transform_0, window_bounds = array<i64: 8, 1>}, {pipeline_mode = #tpu.pipeline_mode<synchronous>, transform_indices = @transform_1, window_bounds = array<i64: 1, 3>}, {pipeline_mode = #tpu.pipeline_mode<synchronous>, transform_indices = @transform_2, window_bounds = array<i64: 1, 3>}, {pipeline_mode = #tpu.pipeline_mode<synchronous>, transform_indices = @transform_3, window_bounds = array<i64: 3, 1>}, {pipeline_mode = #tpu.pipeline_mode<synchronous>, transform_indices = @transform_4, window_bounds = array<i64: 1, 1>}, {transform_indices = @transform_5, window_bounds = array<i64: 8, 1>}]} {
    %c0 = arith.constant 0 : index
    %c0_0 = arith.constant 0 : index
    %0 = vector.load %arg1[%c0, %c0_0] : memref<8x1xf32, #tpu.memory_space<vmem>>, vector<8x1xf32>
    %c0_1 = arith.constant 0 : index
    %c0_2 = arith.constant 0 : index
    %1 = vector.load %arg3[%c0_1, %c0_2] : memref<1x3xf32, #tpu.memory_space<vmem>>, vector<1x3xf32>
    %2 = vector.shape_cast %1 : vector<1x3xf32> to vector<1x3xf32>
    %3 = vector.broadcast %2 : vector<1x3xf32> to vector<8x3xf32>
    %c0_3 = arith.constant 0 : index
    %c0_4 = arith.constant 0 : index
    %4 = vector.load %arg2[%c0_3, %c0_4] : memref<1x3xf32, #tpu.memory_space<vmem>>, vector<1x3xf32>
    %5 = vector.broadcast %0 : vector<8x1xf32> to vector<8x3xf32>
    %6 = vector.broadcast %4 : vector<1x3xf32> to vector<8x3xf32>
    %7 = arith.mulf %5, %6 : vector<8x3xf32>
    %8 = arith.addf %3, %7 : vector<8x3xf32>
    %cst = arith.constant 0.000000e+00 : f32
    %9 = vector.broadcast %cst : f32 to vector<8x3xf32>
    %10 = arith.maximumf %8, %9 : vector<8x3xf32>
    %c0_5 = arith.constant 0 : index
    %c0_6 = arith.constant 0 : index
    %11 = vector.load %arg5[%c0_5, %c0_6] : memref<1x1xf32, #tpu.memory_space<vmem>>, vector<1x1xf32>
    %12 = vector.shape_cast %11 : vector<1x1xf32> to vector<1x1xf32>
    %13 = vector.broadcast %12 : vector<1x1xf32> to vector<8x1xf32>
    %14 = vector.extract_strided_slice %10 {offsets = [0, 0], sizes = [8, 1], strides = [1, 1]} : vector<8x3xf32> to vector<8x1xf32>
    %c0_7 = arith.constant 0 : index
    %c0_8 = arith.constant 0 : index
    %15 = vector.load %arg4[%c0_7, %c0_8] : memref<3x1xf32, #tpu.memory_space<vmem>>, vector<1x1xf32>
    %16 = vector.broadcast %15 : vector<1x1xf32> to vector<8x1xf32>
    %17 = arith.mulf %14, %16 : vector<8x1xf32>
    %18 = arith.addf %13, %17 : vector<8x1xf32>
    %19 = vector.extract_strided_slice %10 {offsets = [0, 1], sizes = [8, 1], strides = [1, 1]} : vector<8x3xf32> to vector<8x1xf32>
    %c1 = arith.constant 1 : index
    %c0_9 = arith.constant 0 : index
    %20 = vector.load %arg4[%c1, %c0_9] : memref<3x1xf32, #tpu.memory_space<vmem>>, vector<1x1xf32>
    %21 = vector.broadcast %20 : vector<1x1xf32> to vector<8x1xf32>
    %22 = arith.mulf %19, %21 : vector<8x1xf32>
    %23 = arith.addf %18, %22 : vector<8x1xf32>
    %24 = vector.extract_strided_slice %10 {offsets = [0, 2], sizes = [8, 1], strides = [1, 1]} : vector<8x3xf32> to vector<8x1xf32>
    %c2 = arith.constant 2 : index
    %c0_10 = arith.constant 0 : index
    %25 = vector.load %arg4[%c2, %c0_10] : memref<3x1xf32, #tpu.memory_space<vmem>>, vector<1x1xf32>
    %26 = vector.broadcast %25 : vector<1x1xf32> to vector<8x1xf32>
    %27 = arith.mulf %24, %26 : vector<8x1xf32>
    %28 = arith.addf %23, %27 : vector<8x1xf32>
    %c0_11 = arith.constant 0 : index
    %c0_12 = arith.constant 0 : index
    %29 = vector.load %arg6[%c0_11, %c0_12] : memref<8x1xf32, #tpu.memory_space<vmem>>, vector<8x1xf32>
    tpu.vector_store %arg6[%c0_11, %c0_12], %28 {strides = array<i32>} : memref<8x1xf32, #tpu.memory_space<vmem>>, vector<8x1xf32>,
    return
  }
  func.func @transform_0(%arg0: i32) -> (i32, i32) {
    %c0_i32 = arith.constant 0 : i32
    %c0_i32_0 = arith.constant 0 : i32
    return %arg0, %c0_i32 : i32, i32
  }
  func.func @transform_1(%arg0: i32) -> (i32, i32) {
    %c0_i32 = arith.constant 0 : i32
    %c0_i32_0 = arith.constant 0 : i32
    %c0_i32_1 = arith.constant 0 : i32
    return %c0_i32, %c0_i32_0 : i32, i32
  }
  func.func @transform_2(%arg0: i32) -> (i32, i32) {
    %c0_i32 = arith.constant 0 : i32
    %c0_i32_0 = arith.constant 0 : i32
    %c0_i32_1 = arith.constant 0 : i32
    return %c0_i32, %c0_i32_0 : i32, i32
  }
  func.func @transform_3(%arg0: i32) -> (i32, i32) {
    %c0_i32 = arith.constant 0 : i32
    %c0_i32_0 = arith.constant 0 : i32
    %c0_i32_1 = arith.constant 0 : i32
    return %c0_i32, %c0_i32_0 : i32, i32
  }
  func.func @transform_4(%arg0: i32) -> (i32, i32) {
    %c0_i32 = arith.constant 0 : i32
    %c0_i32_0 = arith.constant 0 : i32
    %c0_i32_1 = arith.constant 0 : i32
    return %c0_i32, %c0_i32_0 : i32, i32
  }
  func.func @transform_5(%arg0: i32) -> (i32, i32) {
    %c0_i32 = arith.constant 0 : i32
    %c0_i32_0 = arith.constant 0 : i32
    return %arg0, %c0_i32 : i32, i32
  }
}

</mosaic_0001>

<llo_original>
// kernel: tpu_custom_call.1
$region0: #{tpu_custom_call.1}
  #allocation0 [shape = 'u32[]', space=smem, size = 0x4, offset = 0x4, fixed_abs, tag = 'smem constant byte address 0x4 - core index']
  #allocation1 [shape = 'u32[72,128]{1,0:T(1,128)}', space=vmem, size = 0x9000, scoped, tag = 'internal scratch']
  #allocation2 [shape = 'f32[1,1]{1,0:T(1,128)S(1)}', space=vmem, size = 0x200, scoped, tag = 'scoped memory for tpu_custom_call.1']
  %s0 = inlined_call_operand.vmem [shape: f32[8,1], index: 0, kind: input, shape index: {}]
  %s1 = inlined_call_operand.vmem [shape: f32[1,3], index: 1, kind: input, shape index: {}]
  %s2 = inlined_call_operand.vmem [shape: f32[1,3], index: 2, kind: input, shape index: {}]
  %s3 = inlined_call_operand.vmem [shape: f32[3,1], index: 3, kind: input, shape index: {}]
  %s4 = inlined_call_operand.<no memory space> [shape: f32[1,1], index: 4, kind: input, shape index: {}]
  %s5 = inlined_call_operand.vmem [shape: f32[8,1], index: 5, kind: output, shape index: {}]
  %s6 = sld [smem:[#allocation0]]
  $region30: #{tpu_custom_call.1} parent=0
    _
  %s8 = ssub.s32 1, %s6
  %s9 = scalar_select 0, %s8, %s6
  %v10 = vstv %s4
  %11 = vst [vmem:[#allocation2] sm:$0x1] %v10
  // Predicated region
  $region2: #{tpu_custom_call.1} parent=0 // pred_check
    _
  $region3: #{tpu_custom_call.1} parent=0 // pred_check_branch
    %13 = sbr.rel (0) target = $region5
  $region4: #{tpu_custom_call.1} parent=0 // pred_region
    _
  $region5: #{tpu_custom_call.1} parent=0 // pred_fallthru
    _
  // Predicated region
  $region6: #{tpu_custom_call.1} parent=0 // pred_check
    _
  $region7: #{tpu_custom_call.1} parent=0 // pred_check_branch
    %15 = sbr.rel (0) target = $region9
  $region8: #{tpu_custom_call.1} parent=0 // pred_region
    _
  $region9: #{tpu_custom_call.1} parent=0 // pred_fallthru
    _
  // Predicated region
  $region10: #{tpu_custom_call.1} parent=0 // pred_check
    _
  $region11: #{tpu_custom_call.1} parent=0 // pred_check_branch
    %17 = sbr.rel (0) target = $region13
  $region12: #{tpu_custom_call.1} parent=0 // pred_region
    _
  $region13: #{tpu_custom_call.1} parent=0 // pred_fallthru
    _
  // Predicated region
  $region14: #{tpu_custom_call.1} parent=0 // pred_check
    _
  $region15: #{tpu_custom_call.1} parent=0 // pred_check_branch
    %19 = sbr.rel (0) target = $region17
  $region16: #{tpu_custom_call.1} parent=0 // pred_region
    _
  $region17: #{tpu_custom_call.1} parent=0 // pred_fallthru
    _
  // Predicated region
  $region18: #{tpu_custom_call.1} parent=0 // pred_check
    _
  $region19: #{tpu_custom_call.1} parent=0 // pred_check_branch
    %21 = sbr.rel (0) target = $region21
  $region20: #{tpu_custom_call.1} parent=0 // pred_region
    _
  $region21: #{tpu_custom_call.1} parent=0 // pred_fallthru
    _
  %v22 = vld [vmem:[%s0] sm:$0xff]
  %v23 = vld [vmem:[%s2] sm:$0x1]
  %v25 = vperm.slane %v23, 0
  %v27 = vld [vmem:[%s1] sm:$0x1]
  %29 = vset.pattern.permute.xlu0 0
  %30 = vperm.xlu0 %29, %v22
  %v31 = vpop.permute.xlu0 %30
  %v34 = vperm.slane %v27, 0
  %v36 = vmul.f32 %v31, %v34
  %v37 = vadd.f32 %v25, %v36
  %v38 = vmax.f32 %v37, 0.0
  %v39 = vld [vmem:[#allocation2] sm:$0x1]
  %v41 = vperm.slane %v39, 0
  %v43 = vld [vmem:[%s3] sm:$0x1]
  %v44 = vperm.slane %v43, 0
  %v45 = vmul.f32 %v38, %v44
  %v46 = vadd.f32 %v41, %v45
  %v47 = vld [vmem:[%s3 + $0x1] sm:$0x1]
  %v48 = vperm.slane %v47, 0
  %50 = vrot.lane.b32.xlu0 %v48, 1
  %v51 = vpop.permute.xlu0 %50
  %v53 = vmul.f32 %v38, %v51
  %55 = vrot.lane.b32.xlu0 %v53, 127
  %v56 = vpop.permute.xlu0 %55
  %v58 = vadd.f32 %v46, %v56
  %v59 = vld [vmem:[%s3 + $0x2] sm:$0x1]
  %v60 = vperm.slane %v59, 0
  %62 = vrot.lane.b32.xlu0 %v60, 2
  %v63 = vpop.permute.xlu0 %62
  %v65 = vmul.f32 %v38, %v63
  %67 = vrot.lane.b32.xlu0 %v65, 126
  %v68 = vpop.permute.xlu0 %67
  %v70 = vadd.f32 %v58, %v68
  %vm71 = vcmask 7168
  %72 = vst.msk [vmem:[%s5] sm:$0xff] %vm71, %v70
  // Predicated region
  $region22: #{tpu_custom_call.1} parent=0 // pred_check
    _
  $region23: #{tpu_custom_call.1} parent=0 // pred_check_branch
    %74 = sbr.rel (0) target = $region25
  $region24: #{tpu_custom_call.1} parent=0 // pred_region
    _
  $region25: #{tpu_custom_call.1} parent=0 // pred_fallthru
    _
  // Predicated region
  $region26: #{tpu_custom_call.1} parent=0 // pred_check
    _
  $region27: #{tpu_custom_call.1} parent=0 // pred_check_branch
    %76 = sbr.rel (0) target = $region29
  $region28: #{tpu_custom_call.1} parent=0 // pred_region
    _
  $region29: #{tpu_custom_call.1} parent=0 // pred_fallthru
    _

</llo_original>
